<compile_context>
chip_gen: v6e
topology: v6e:2x2x1
jax: 0.10.0
libtpu: 0.0.40
codegen_flags: <defaults>
</compile_context>

<pallas_src>
import functools
import math

import jax
import jax.numpy as jnp
from jax.experimental import pallas as pl
from jax.experimental.pallas import tpu as pltpu

# CartPoleSwingUpParams().x_threshold default value (gym_cartpole_swingup)
X_THRESHOLD = 2.4

_LANES = 128            # batch elements per vreg lane row
_TILE_ROWS = 4096       # rows per grid step: 2 MiB f32 in / 512 KiB int8 out
# Below this many batch elements, a fused jnp expression beats a kernel launch.
_MIN_PALLAS_BATCH = 65536


def _make_termination_kernel(threshold):
    # TODO(synk): if a traced/array threshold is ever needed, route it through
    # an SMEM scalar instead of this Python-float closure.
    def kernel(x_ref, out_ref):
        # x_ref:   (TB, 128) — cart positions, batch mapped to lanes
        # out_ref: (TB, 128) int8 — termination mask (1 = done)
        out_ref[...] = (jnp.abs(x_ref[...]) > threshold).astype(jnp.int8)

    return kernel


def cartpole_swingup_termination(
    state,
    action,
    next_state,
    x_threshold=X_THRESHOLD,
    *,
    min_pallas_batch=_MIN_PALLAS_BATCH,
):
    """Mirrors CartPoleSwingUpTermination.forward; `state`/`action` are unused."""
    del state, action  # unused by the termination function (matches PyTorch)

    batch_shape = next_state.shape[:-1]
    x = next_state[..., 0]  # cart position column, shape == batch_shape
    batch = math.prod(batch_shape) if batch_shape else 1

    # --- small-batch fast path ----------------------------------------------
    # Fuses into the caller's XLA graph; strictly faster than any kernel launch
    # for typical RL batch sizes.
    if batch < min_pallas_batch:
        return jnp.abs(x) > x_threshold

    # --- Pallas path (large batches) ----------------------------------------
    # Lane-dense (rows, 128) slab; pad only to the next multiple of 128 (the
    # pad fuses with the column slice in XLA — no extra HBM pass).
    x = x.reshape(-1)
    rows = pl.cdiv(batch, _LANES)
    padded = rows * _LANES
    if padded != batch:
        # Pad value 0.0 -> |0| > 2.4 is False; padded tail is sliced off below.
        x = jnp.pad(x, (0, padded - batch))
    x2d = x.reshape(rows, _LANES)

    # Single block if it fits one tile (block == full array, any row count is
    # legal); otherwise 4096-row tiles with a ragged, masked final block.
    tile_rows = rows if rows <= _TILE_ROWS else _TILE_ROWS
    grid = (pl.cdiv(rows, tile_rows),)

    out_i8 = pl.pallas_call(
        _make_termination_kernel(float(x_threshold)),
        out_shape=jax.ShapeDtypeStruct((rows, _LANES), jnp.int8),
        grid=grid,
        in_specs=[pl.BlockSpec((tile_rows, _LANES), lambda i: (i, 0))],
        out_specs=pl.BlockSpec((tile_rows, _LANES), lambda i: (i, 0)),
        compiler_params=pltpu.CompilerParams(
            dimension_semantics=("parallel",),
        ),
    )(x2d)

    # Glue: drop padding, view as bool, restore original leading batch dims.
    done = (out_i8.reshape(-1)[:batch] != 0).reshape(batch_shape)
    return done


if __name__ == "__main__":
    key = jax.random.PRNGKey(0)
    k_s, k_a, k_ns, k_ns2 = jax.random.split(key, 4)

    batch = 8
    obs_dim = 5   # CartPoleSwingUp obs: [x, x_dot, cos(theta), sin(theta), theta_dot]
    act_dim = 1

    state = jax.random.normal(k_s, (batch, obs_dim), dtype=jnp.float32)
    action = jax.random.normal(k_a, (batch, act_dim), dtype=jnp.float32)
    # Scale positions so some entries exceed |x| > 2.4 and some do not.
    next_state = 3.0 * jax.random.normal(k_ns, (batch, obs_dim), dtype=jnp.float32)

    # Force the Pallas path (min_pallas_batch=0) so the kernel itself runs.
    done = cartpole_swingup_termination(
        state, action, next_state, min_pallas_batch=0
    )
    done = jax.block_until_ready(done)

    ref = jnp.abs(next_state[..., 0]) > X_THRESHOLD
    assert done.dtype == jnp.bool_
    assert done.shape == (batch,)
    assert bool(jnp.all(done == ref))

    # Arbitrary leading batch dims + ragged lane-padding path (Pallas forced).
    next_state_3d = 3.0 * jax.random.normal(k_ns2, (4, 300, obs_dim), dtype=jnp.float32)
    done_3d = jax.block_until_ready(
        cartpole_swingup_termination(None, None, next_state_3d, min_pallas_batch=0)
    )
    ref_3d = jnp.abs(next_state_3d[..., 0]) > X_THRESHOLD
    assert done_3d.dtype == jnp.bool_
    assert done_3d.shape == (4, 300)
    assert bool(jnp.all(done_3d == ref_3d))

    # Default (small-batch) fast path — pure jnp, no kernel launch.
    done_fast = jax.block_until_ready(
        cartpole_swingup_termination(state, action, next_state)
    )
    assert done_fast.dtype == jnp.bool_
    assert bool(jnp.all(done_fast == ref))

    print("KERNEL_OK")
</pallas_src>

<mosaic_0001>
module attributes {stable_mosaic.version = 11 : i64} {
  func.func @kernel(%arg0: i32, %arg1: memref<1x128xf32, #tpu.memory_space<vmem>>, %arg2: memref<1x128xi8, #tpu.memory_space<vmem>>) attributes {dimension_semantics = [#tpu.dimension_semantics<parallel>], iteration_bounds = array<i64: 1>, scalar_prefetch = 0 : i64, scratch_operands = 0 : i64, tpu.core_type = #tpu.core_type<tc>, window_params = [{transform_indices = @transform_0, window_bounds = array<i64: 1, 128>}, {transform_indices = @transform_1, window_bounds = array<i64: 1, 128>}]} {
    %c0 = arith.constant 0 : index
    %c0_0 = arith.constant 0 : index
    %0 = vector.load %arg1[%c0, %c0_0] : memref<1x128xf32, #tpu.memory_space<vmem>>, vector<1x128xf32>
    %1 = math.absf %0 : vector<1x128xf32>
    %cst = arith.constant 2.400000e+00 : f32
    %2 = vector.broadcast %cst : f32 to vector<1x128xf32>
    %3 = arith.cmpf ogt, %1, %2 : vector<1x128xf32>
    %4 = arith.extui %3 : vector<1x128xi1> to vector<1x128xi8>
    %c0_1 = arith.constant 0 : index
    %c0_2 = arith.constant 0 : index
    %5 = vector.load %arg2[%c0_1, %c0_2] : memref<1x128xi8, #tpu.memory_space<vmem>>, vector<1x128xi8>
    tpu.vector_store %arg2[%c0_1, %c0_2], %4 {strides = array<i32>} : memref<1x128xi8, #tpu.memory_space<vmem>>, vector<1x128xi8>,
    return
  }
  func.func @transform_0(%arg0: i32) -> (i32, i32) {
    %c0_i32 = arith.constant 0 : i32
    %c0_i32_0 = arith.constant 0 : i32
    return %arg0, %c0_i32 : i32, i32
  }
  func.func @transform_1(%arg0: i32) -> (i32, i32) {
    %c0_i32 = arith.constant 0 : i32
    %c0_i32_0 = arith.constant 0 : i32
    return %arg0, %c0_i32 : i32, i32
  }
}

</mosaic_0001>

<llo_original>
// kernel: tpu_custom_call.1
$region0: #{tpu_custom_call.1}
  #allocation0 [shape = 'u32[]', space=smem, size = 0x4, offset = 0x4, fixed_abs, tag = 'smem constant byte address 0x4 - core index']
  #allocation1 [shape = 'u32[144,128]{1,0:T(1,128)}', space=vmem, size = 0x12000, scoped, tag = 'internal scratch']
  %s0 = inlined_call_operand.hbm [shape: f32[1,128], index: 0, kind: input, shape index: {}]
  %s1 = inlined_call_operand.hbm [shape: s8[1,128], index: 1, kind: output, shape index: {}]
  %s2 = sld [smem:[#allocation0]]
  $region18: #{tpu_custom_call.1} parent=0
    _
  %s4 = ssub.s32 1, %s2
  %s5 = scalar_select 0, %s4, %s2
  $region1: #{tpu_custom_call.1} parent=0
    #allocation2 [shape = 'u8[512]{0}', space=vmem, size = 0x400, scoped, tag = 'input window, operand 0, single buffered']
    #allocation3 [shape = 's32[1]{0}', space=sflag, size = 0x4, scoped, tag = 'scoped memory for tpu_custom_call.1']
    #allocation4 [shape = 's32[1]{0}', space=sflag, size = 0x4, scoped, tag = 'scoped memory for tpu_custom_call.1']
    #allocation5 [shape = 'u8[512]{0}', space=vmem, size = 0x400, scoped, tag = 'output window, operand 0, single buffered']
    %6 = vsyncpa [#allocation3], 0
    %7 = vsyncpa [#allocation4], 0
    // Predicated region
    $region2: #{tpu_custom_call.1} parent=1 // pred_check
      _
    $region3: #{tpu_custom_call.1} parent=1 // pred_check_branch
      %9 = sbr.rel (0) target = $region5
    $region4: #{tpu_custom_call.1} parent=1 // pred_region
      %s11 = ssub.s32 16, 16
      %12 = vsyncadd [#allocation3], %s11
      %s14 = sshll.u32 [#allocation2], 4
      %s15 = int_to_ptr.vmem [resolvable:$true] %s14
      %17 = dma.hbm_to_vmem [thread:$0]  %s0, 16, %s15, [#allocation3]
    $region5: #{tpu_custom_call.1} parent=1 // pred_fallthru
      _
    // Predicated region
    $region6: #{tpu_custom_call.1} parent=1 // pred_check
      _
    $region7: #{tpu_custom_call.1} parent=1 // pred_check_branch
      %19 = sbr.rel (0) target = $region9
    $region8: #{tpu_custom_call.1} parent=1 // pred_region
      %20 = dma.done [#allocation3], 16
    $region9: #{tpu_custom_call.1} parent=1 // pred_fallthru
      _
    %v23 = vld [vmem:[#allocation2] sm:$0x1]
    %v24 = vand.u32 2147483647, %v23
    %vm25 = vcmp.gt.f32.partialorder %v24, 2.4
    %v26 = vsel %vm25, 1, 0
    %v27 = vpack.c.b16 %v26, %v26
    %v28 = vpack.c.b8 %v27, %v27
    %vm29 = vnez %v28
    %v30 = vsel %vm29, 16843009, 0
    %vm31 = vcmask 1040384
    %vm32 = vsmask.f32 0
    %vm33 = vmand %vm31, %vm32
    %v34 = vld [vmem:[#allocation5] sm:$0x1]
    %v35 = vsel %vm33, %v30, %v34
    %36 = vst [vmem:[#allocation5] sm:$0x1] %v35
    // Predicated region
    $region10: #{tpu_custom_call.1} parent=1 // pred_check
      _
    $region11: #{tpu_custom_call.1} parent=1 // pred_check_branch
      %38 = sbr.rel (0) target = $region13
    $region12: #{tpu_custom_call.1} parent=1 // pred_region
      %s40 = ssub.s32 16, 16
      %41 = vsyncadd [#allocation4], %s40
      %s43 = sshll.u32 [#allocation5], 4
      %s44 = int_to_ptr.vmem [resolvable:$true] %s43
      %46 = dma.vmem_to_hbm [thread:$0]  %s44, 16, %s1, [#allocation4]
    $region13: #{tpu_custom_call.1} parent=1 // pred_fallthru
      _
    // Predicated region
    $region14: #{tpu_custom_call.1} parent=1 // pred_check
      _
    $region15: #{tpu_custom_call.1} parent=1 // pred_check_branch
      %48 = sbr.rel (0) target = $region17
    $region16: #{tpu_custom_call.1} parent=1 // pred_region
      %49 = dma.done [#allocation4], 16
    $region17: #{tpu_custom_call.1} parent=1 // pred_fallthru
      _
    %50 = vsyncpa [#allocation3], 1
    %51 = vsyncpa [#allocation4], 1

</llo_original>
